<compile_context>
chip_gen: v7x
topology: tpu7x:2x2x1
jax: 0.10.0
libtpu: 0.0.40
codegen_flags: <defaults>
</compile_context>

<pallas_src>
import functools
import math

import numpy as np
import jax
import jax.numpy as jnp
from jax.experimental import pallas as pl
from jax.experimental.pallas import tpu as pltpu


# ---------------------------------------------------------------------------
# Host-side matrix construction (memoized; runs once per (H, W, S, tb)).
# ---------------------------------------------------------------------------
def _fold_matrix(filter_size, n_in):
    """Row/col fold matrix P (filter_size x n_in) replicating Common_spectral_pool."""
    S, N = filter_size, n_in
    P = np.zeros((S, N), dtype=np.float64)
    if S % 2 == 1:
        n = (S - 1) // 2
        for i in range(n + 1):
            P[i, i] = 1.0
        for j in range(n):
            P[n + 1 + j, N - n + j] = 1.0
    else:
        n = S // 2
        for i in range(n):
            P[i, i] = 1.0
        # middle row/col: sqrt(0.5) * (index n + index -n); if N == S they coincide.
        P[n, n] += np.sqrt(0.5)
        P[n, N - n] += np.sqrt(0.5)
        for j in range(n - 1):
            P[n + 1 + j, N - (n - 1) + j] = 1.0
    return P


def _dft_matrix(N, sign):
    k = np.arange(N)
    return np.exp(sign * 2j * np.pi * np.outer(k, k) / N)


@functools.lru_cache(maxsize=None)
def _spectral_matrices(H, W, S, tb):
    Ph = _fold_matrix(S, H)
    Pw = _fold_matrix(S, W)
    D_H = _dft_matrix(H, -1)
    D_W = _dft_matrix(W, -1)
    Dinv_S = _dft_matrix(S, +1) / S            # ifft normalization (1/S per axis)

    L = Dinv_S @ Ph @ D_H                       # (S, H) complex
    R = D_W @ Pw.T @ Dinv_S                     # (W, S) complex

    Lr = np.real(L)
    Li = np.imag(L)
    Rr = np.real(R)
    Ri = np.imag(R)

    # Block-diagonal right weights: within a block of tb lane-stacked images, image
    # b contracts rows b*W:(b+1)*W into lanes b*S:(b+1)*S (real half) and
    # tb*S + b*S : tb*S + (b+1)*S (imag half).  Stage-1 output is therefore already
    # lane-stacked per image; no in-kernel restacking is needed.
    Rbd = np.zeros((tb * W, 2 * tb * S), dtype=np.float64)
    for b in range(tb):
        Rbd[b * W:(b + 1) * W, b * S:(b + 1) * S] = Rr
        Rbd[b * W:(b + 1) * W, tb * S + b * S:tb * S + (b + 1) * S] = Ri

    return (jnp.asarray(Lr, jnp.float32),
            jnp.asarray(Li, jnp.float32),
            jnp.asarray(Rbd, jnp.float32))


# ---------------------------------------------------------------------------
# Pallas kernel: tb lane-stacked images per grid step.
#   stage 1: (H, tb*W) @ (tb*W, 2*tb*S)    -> lane-stacked real & imag halves
#   stage 2: Lr @ t_r - Li @ t_i, ReLU     -> lane-dense (S, tb*S) output block
# ---------------------------------------------------------------------------
def _spectral_pool_kernel(x_ref, lr_ref, li_ref, rbd_ref, o_ref, *, ts):
    t = jnp.dot(x_ref[...], rbd_ref[...], preferred_element_type=jnp.float32)  # (H, 2*ts)
    y = (jnp.dot(lr_ref[...], t[:, :ts], preferred_element_type=jnp.float32)
         - jnp.dot(li_ref[...], t[:, ts:], preferred_element_type=jnp.float32))  # (S, ts)
    o_ref[...] = jnp.maximum(y, 0.0)


def _num_tensorcores():
    """2 for v7x (2 TensorCores per chip), else 1.  Best-effort; defaults to 1."""
    try:
        kind = (jax.devices()[0].device_kind or "").lower()
        if "v7" in kind:
            return 2
    except Exception:
        pass
    return 1


def _choose_tb(n_img, W, S, num_tc):
    """Images per grid step (lane-stacked)."""
    # Smallest tb making both tb*W and tb*S multiples of 128 (aligned input block,
    # unmasked output store) when the grid has more than one step.
    unit = int(np.lcm(128 // math.gcd(128, W), 128 // math.gcd(128, S)))
    if n_img <= unit:
        return n_img                    # single block == full arrays (always legal)
    k_target = 256                      # stage-1 contraction depth target (MXU pass)
    tb = max(unit, (max(k_target // W, 1) // unit) * unit)
    if num_tc >= 2:
        # v7x only: keep >= num_tc grid steps so both TensorCores get work.
        tb = min(tb, max(unit, (pl.cdiv(n_img, num_tc) // unit) * unit))
    if tb >= n_img:
        return n_img                    # single full block, no padding needed
    return tb


def get_spectral_pool_same(x, size):
    """x: (B, C, H, W) float32 (NCHW).  Returns (B, C, size, size) float32."""
    B, C, H, W = x.shape
    S = int(size)
    assert S >= 3

    n_img = B * C
    tb = _choose_tb(n_img, W, S, _num_tensorcores())
    num_blocks = pl.cdiv(n_img, tb)
    n_pad = num_blocks * tb

    Lr, Li, Rbd = _spectral_matrices(H, W, S, tb)

    xf = x.reshape(n_img, H, W).astype(jnp.float32)
    if n_pad != n_img:
        # Ragged tail: pad with zero images (fused by XLA into the transpose below).
        xf = jnp.pad(xf, ((0, n_pad - n_img), (0, 0), (0, 0)))
    # Lane-stack images: (n_pad, H, W) -> (H, n_pad*W).  Single XLA transpose.
    xT = xf.transpose(1, 0, 2).reshape(H, n_pad * W)

    kernel = functools.partial(_spectral_pool_kernel, ts=tb * S)

    out = pl.pallas_call(
        kernel,
        out_shape=jax.ShapeDtypeStruct((S, n_pad * S), jnp.float32),
        grid_spec=pltpu.PrefetchScalarGridSpec(
            num_scalar_prefetch=0,
            grid=(num_blocks,),
            in_specs=[
                pl.BlockSpec((H, tb * W), lambda i: (0, i)),          # tb images / step
                pl.BlockSpec((S, H), lambda i: (0, 0)),               # Lr (resident)
                pl.BlockSpec((S, H), lambda i: (0, 0)),               # Li (resident)
                pl.BlockSpec((tb * W, 2 * tb * S), lambda i: (0, 0)),  # block-diag [Rr|Ri]
            ],
            out_specs=pl.BlockSpec((S, tb * S), lambda i: (0, i)),
        ),
        compiler_params=pltpu.CompilerParams(dimension_semantics=("parallel",)),
    )(xT, Lr, Li, Rbd)

    # Undo the lane stacking: (S, n_pad*S) -> (n_pad, S, S) -> (B, C, S, S).
    out = out.reshape(S, n_pad, S).transpose(1, 0, 2)[:n_img]
    return out.reshape(B, C, S, S)


# ---------------------------------------------------------------------------
# Pure-JAX reference (mirrors the PyTorch forward) for correctness checking.
# ---------------------------------------------------------------------------
def _common_spectral_pool_ref(images, filter_size):
    if filter_size % 2 == 1:
        n = (filter_size - 1) // 2
        tl = images[:, :, :n + 1, :n + 1]
        tr = images[:, :, :n + 1, -n:]
        bl = images[:, :, -n:, :n + 1]
        br = images[:, :, -n:, -n:]
        top = jnp.concatenate([tl, tr], axis=3)
        bot = jnp.concatenate([bl, br], axis=3)
        return jnp.concatenate([top, bot], axis=2)
    n = filter_size // 2
    s = 0.5 ** 0.5
    tl = images[:, :, :n, :n]
    tm = (s * (images[:, :, :n, n] + images[:, :, :n, -n]))[..., None]
    tr = images[:, :, :n, -(n - 1):]
    ml = (s * (images[:, :, n, :n] + images[:, :, -n, :n]))[:, :, None, :]
    mm = (0.5 * (images[:, :, n, n] + images[:, :, n, -n]
                 + images[:, :, -n, n] + images[:, :, -n, -n]))[:, :, None, None]
    mr = (s * (images[:, :, n, -(n - 1):] + images[:, :, -n, -(n - 1):]))[:, :, None, :]
    bl = images[:, :, -(n - 1):, :n]
    bm = (s * (images[:, :, -(n - 1):, n] + images[:, :, -(n - 1):, -n]))[..., None]
    br = images[:, :, -(n - 1):, -(n - 1):]
    top = jnp.concatenate([tl, tm, tr], axis=3)
    mid = jnp.concatenate([ml, mm, mr], axis=3)
    bot = jnp.concatenate([bl, bm, br], axis=3)
    return jnp.concatenate([top, mid, bot], axis=2)


def _reference(x, size):
    imf = jnp.fft.fft2(x.astype(jnp.complex64))
    z = _common_spectral_pool_ref(imf, size)
    out = jnp.real(jnp.fft.ifft2(z))
    return jnp.maximum(out, 0.0)


if __name__ == "__main__":
    B, C, H, W = 2, 4, 16, 16
    key = jax.random.PRNGKey(0)
    x = jax.random.normal(key, (B, C, H, W), dtype=jnp.float32)

    # Get_spectral_pool_same(size=16, nin=C): "same"-sized spectral pooling.
    out = jax.block_until_ready(get_spectral_pool_same(x, 16))
    ref = jax.block_until_ready(_reference(x, 16))
    assert out.shape == (B, C, 16, 16)
    assert out.dtype == jnp.float32
    np.testing.assert_allclose(np.asarray(out), np.asarray(ref), atol=2e-3, rtol=2e-3)

    # Odd filter size exercises the other crop/fold branch (true downsampling).
    out7 = jax.block_until_ready(get_spectral_pool_same(x, 7))
    ref7 = jax.block_until_ready(_reference(x, 7))
    assert out7.shape == (B, C, 7, 7)
    np.testing.assert_allclose(np.asarray(out7), np.asarray(ref7), atol=2e-3, rtol=2e-3)

    print("KERNEL_OK")
</pallas_src>

<mosaic_0001>
module attributes {stable_mosaic.version = 11 : i64} {
  func.func @_spectral_pool_kernel(%arg0: i32, %arg1: memref<16x128xf32, #tpu.memory_space<vmem>>, %arg2: memref<16x16xf32, #tpu.memory_space<vmem>>, %arg3: memref<16x16xf32, #tpu.memory_space<vmem>>, %arg4: memref<128x256xf32, #tpu.memory_space<vmem>>, %arg5: memref<16x128xf32, #tpu.memory_space<vmem>>) attributes {dimension_semantics = [#tpu.dimension_semantics<parallel>], iteration_bounds = array<i64: 1>, scalar_prefetch = 0 : i64, scratch_operands = 0 : i64, tpu.core_type = #tpu.core_type<tc>, window_params = [{transform_indices = @transform_0, window_bounds = array<i64: 16, 128>}, {pipeline_mode = #tpu.pipeline_mode<synchronous>, transform_indices = @transform_1, window_bounds = array<i64: 16, 16>}, {pipeline_mode = #tpu.pipeline_mode<synchronous>, transform_indices = @transform_2, window_bounds = array<i64: 16, 16>}, {pipeline_mode = #tpu.pipeline_mode<synchronous>, transform_indices = @transform_3, window_bounds = array<i64: 128, 256>}, {transform_indices = @transform_4, window_bounds = array<i64: 16, 128>}]} {
    %c0 = arith.constant 0 : index
    %c0_0 = arith.constant 0 : index
    %0 = vector.load %arg1[%c0, %c0_0] : memref<16x128xf32, #tpu.memory_space<vmem>>, vector<16x128xf32>
    %c0_1 = arith.constant 0 : index
    %c0_2 = arith.constant 0 : index
    %1 = vector.load %arg4[%c0_1, %c0_2] : memref<128x256xf32, #tpu.memory_space<vmem>>, vector<128x256xf32>
    %cst = arith.constant dense<0.000000e+00> : vector<16x256xf32>
    %2 = tpu.matmul %0, %1, %cst {dimension_numbers = #tpu.dot_dimension_numbers<[1], [0], [0], [1], [0, 0, 1, 1], [], []>} : vector<16x128xf32>, vector<128x256xf32>, vector<16x256xf32> -> vector<16x256xf32>
    %c0_3 = arith.constant 0 : index
    %c0_4 = arith.constant 0 : index
    %3 = vector.load %arg2[%c0_3, %c0_4] : memref<16x16xf32, #tpu.memory_space<vmem>>, vector<16x16xf32>
    %4 = vector.extract_strided_slice %2 {offsets = [0, 0], sizes = [16, 128], strides = [1, 1]} : vector<16x256xf32> to vector<16x128xf32>
    %cst_5 = arith.constant dense<0.000000e+00> : vector<16x128xf32>
    %5 = tpu.matmul %3, %4, %cst_5 {dimension_numbers = #tpu.dot_dimension_numbers<[1], [0], [0], [1], [0, 0, 1, 1], [], []>} : vector<16x16xf32>, vector<16x128xf32>, vector<16x128xf32> -> vector<16x128xf32>
    %c0_6 = arith.constant 0 : index
    %c0_7 = arith.constant 0 : index
    %6 = vector.load %arg3[%c0_6, %c0_7] : memref<16x16xf32, #tpu.memory_space<vmem>>, vector<16x16xf32>
    %7 = vector.extract_strided_slice %2 {offsets = [0, 128], sizes = [16, 128], strides = [1, 1]} : vector<16x256xf32> to vector<16x128xf32>
    %cst_8 = arith.constant dense<0.000000e+00> : vector<16x128xf32>
    %8 = tpu.matmul %6, %7, %cst_8 {dimension_numbers = #tpu.dot_dimension_numbers<[1], [0], [0], [1], [0, 0, 1, 1], [], []>} : vector<16x16xf32>, vector<16x128xf32>, vector<16x128xf32> -> vector<16x128xf32>
    %9 = arith.subf %5, %8 : vector<16x128xf32>
    %cst_9 = arith.constant 0.000000e+00 : f32
    %10 = vector.broadcast %cst_9 : f32 to vector<16x128xf32>
    %11 = arith.maximumf %9, %10 : vector<16x128xf32>
    %c0_10 = arith.constant 0 : index
    %c0_11 = arith.constant 0 : index
    %12 = vector.load %arg5[%c0_10, %c0_11] : memref<16x128xf32, #tpu.memory_space<vmem>>, vector<16x128xf32>
    tpu.vector_store %arg5[%c0_10, %c0_11], %11 {strides = array<i32>} : memref<16x128xf32, #tpu.memory_space<vmem>>, vector<16x128xf32>,
    return
  }
  func.func @transform_0(%arg0: i32) -> (i32, i32) {
    %c0_i32 = arith.constant 0 : i32
    %c0_i32_0 = arith.constant 0 : i32
    return %c0_i32, %arg0 : i32, i32
  }
  func.func @transform_1(%arg0: i32) -> (i32, i32) {
    %c0_i32 = arith.constant 0 : i32
    %c0_i32_0 = arith.constant 0 : i32
    %c0_i32_1 = arith.constant 0 : i32
    return %c0_i32, %c0_i32_0 : i32, i32
  }
  func.func @transform_2(%arg0: i32) -> (i32, i32) {
    %c0_i32 = arith.constant 0 : i32
    %c0_i32_0 = arith.constant 0 : i32
    %c0_i32_1 = arith.constant 0 : i32
    return %c0_i32, %c0_i32_0 : i32, i32
  }
  func.func @transform_3(%arg0: i32) -> (i32, i32) {
    %c0_i32 = arith.constant 0 : i32
    %c0_i32_0 = arith.constant 0 : i32
    %c0_i32_1 = arith.constant 0 : i32
    return %c0_i32, %c0_i32_0 : i32, i32
  }
  func.func @transform_4(%arg0: i32) -> (i32, i32) {
    %c0_i32 = arith.constant 0 : i32
    %c0_i32_0 = arith.constant 0 : i32
    return %c0_i32, %arg0 : i32, i32
  }
}

</mosaic_0001>

<llo_original>
// kernel: tpu_custom_call.1
$region0: #{tpu_custom_call.1}
  #allocation0 [shape = 'u32[]', space=smem, size = 0x4, offset = 0x4, fixed_abs, tag = 'smem constant byte address 0x4 - core index']
  #allocation1 [shape = 'u32[144,128]{1,0:T(1,128)}', space=vmem, size = 0x12000, scoped, tag = 'internal scratch']
  %s0 = inlined_call_operand.hbm [shape: f32[16,128], index: 0, kind: input, shape index: {}]
  %s1 = inlined_call_operand.hbm [shape: f32[16,16], index: 1, kind: input, shape index: {}]
  %s2 = inlined_call_operand.hbm [shape: f32[16,16], index: 2, kind: input, shape index: {}]
  %s3 = inlined_call_operand.hbm [shape: f32[128,256], index: 3, kind: input, shape index: {}]
  %s4 = inlined_call_operand.hbm [shape: f32[16,128], index: 4, kind: output, shape index: {}]
  %s5 = sld [smem:[#allocation0]]
  $region42: #{tpu_custom_call.1} parent=0
    _
  %s7 = ssub.s32 1, %s5
  %s8 = scalar_select 0, %s7, %s5
  $region1: #{tpu_custom_call.1} parent=0
    #allocation2 [shape = 'u8[8192]{0}', space=vmem, size = 0x2000, scoped, tag = 'input window, operand 0, single buffered']
    #allocation3 [shape = 's32[1]{0}', space=sflag, size = 0x4, scoped, tag = 'scoped memory for tpu_custom_call.1']
    #allocation4 [shape = 's32[1]{0}', space=sflag, size = 0x4, scoped, tag = 'scoped memory for tpu_custom_call.1']
    #allocation5 [shape = 'u8[8192]{0}', space=vmem, size = 0x2000, scoped, tag = 'input window, operand 1, single buffered']
    #allocation6 [shape = 's32[1]{0}', space=sflag, size = 0x4, scoped, tag = 'scoped memory for tpu_custom_call.1']
    #allocation7 [shape = 'u8[8192]{0}', space=vmem, size = 0x2000, scoped, tag = 'input window, operand 2, single buffered']
    #allocation8 [shape = 'u8[131072]{0}', space=vmem, size = 0x20000, scoped, tag = 'input window, operand 3, single buffered']
    #allocation9 [shape = 's32[1]{0}', space=sflag, size = 0x4, scoped, tag = 'scoped memory for tpu_custom_call.1']
    #allocation10 [shape = 'u8[8192]{0}', space=vmem, size = 0x2000, scoped, tag = 'output window, operand 0, single buffered']
    %9 = vsyncpa [#allocation3], 0
    %10 = vsyncpa [#allocation6], 0
    %11 = vsyncpa [#allocation9], 0
    %12 = vsyncpa [#allocation4], 0
    // Predicated region
    $region2: #{tpu_custom_call.1} parent=1 // pred_check
      _
    $region3: #{tpu_custom_call.1} parent=1 // pred_check_branch
      %14 = sbr.rel (0) target = $region5
    $region4: #{tpu_custom_call.1} parent=1 // pred_region
      %s16 = ssub.s32 256, 256
      %17 = vsyncadd [#allocation3], %s16
      %s18 = sshll.u32 [#allocation2], 4
      %s19 = int_to_ptr.vmem [resolvable:$true] %s18
      %24 = dma.hbm_to_vmem [thread:$0]  %s0, 256, %s19, [#allocation3], 128, 128, 8
    $region5: #{tpu_custom_call.1} parent=1 // pred_fallthru
      _
    // Predicated region
    $region6: #{tpu_custom_call.1} parent=1 // pred_check
      _
    $region7: #{tpu_custom_call.1} parent=1 // pred_check_branch
      %26 = sbr.rel (0) target = $region9
    $region8: #{tpu_custom_call.1} parent=1 // pred_region
      %s28 = ssub.s32 256, 256
      %29 = vsyncadd [#allocation6], %s28
      %s30 = sshll.u32 [#allocation5], 4
      %s31 = int_to_ptr.vmem [resolvable:$true] %s30
      %36 = dma.hbm_to_vmem [thread:$0]  %s1, 256, %s31, [#allocation6], 128, 128, 8
    $region9: #{tpu_custom_call.1} parent=1 // pred_fallthru
      _
    // Predicated region
    $region10: #{tpu_custom_call.1} parent=1 // pred_check
      _
    $region11: #{tpu_custom_call.1} parent=1 // pred_check_branch
      %38 = sbr.rel (0) target = $region13
    $region12: #{tpu_custom_call.1} parent=1 // pred_region
      %s40 = ssub.s32 256, 256
      %41 = vsyncadd [#allocation6], %s40
      %s42 = sshll.u32 [#allocation7], 4
      %s43 = int_to_ptr.vmem [resolvable:$true] %s42
      %48 = dma.hbm_to_vmem [thread:$0]  %s2, 256, %s43, [#allocation6], 128, 128, 8
    $region13: #{tpu_custom_call.1} parent=1 // pred_fallthru
      _
    // Predicated region
    $region14: #{tpu_custom_call.1} parent=1 // pred_check
      _
    $region15: #{tpu_custom_call.1} parent=1 // pred_check_branch
      %50 = sbr.rel (0) target = $region17
    $region16: #{tpu_custom_call.1} parent=1 // pred_region
      %s52 = ssub.s32 4096, 4096
      %53 = vsyncadd [#allocation9], %s52
      %s54 = sshll.u32 [#allocation8], 4
      %s55 = int_to_ptr.vmem [resolvable:$true] %s54
      %60 = dma.hbm_to_vmem [thread:$0]  %s3, 4096, %s55, [#allocation9], 256, 256, 16
    $region17: #{tpu_custom_call.1} parent=1 // pred_fallthru
      _
    // Predicated region
    $region18: #{tpu_custom_call.1} parent=1 // pred_check
      _
    $region19: #{tpu_custom_call.1} parent=1 // pred_check_branch
      %62 = sbr.rel (0) target = $region21
    $region20: #{tpu_custom_call.1} parent=1 // pred_region
      %63 = dma.done [#allocation3], 256
    $region21: #{tpu_custom_call.1} parent=1 // pred_fallthru
      _
    // Predicated region
    $region22: #{tpu_custom_call.1} parent=1 // pred_check
      _
    $region23: #{tpu_custom_call.1} parent=1 // pred_check_branch
      %65 = sbr.rel (0) target = $region25
    $region24: #{tpu_custom_call.1} parent=1 // pred_region
      %66 = dma.done [#allocation6], 256
    $region25: #{tpu_custom_call.1} parent=1 // pred_fallthru
      _
    // Predicated region
    $region26: #{tpu_custom_call.1} parent=1 // pred_check
      _
    $region27: #{tpu_custom_call.1} parent=1 // pred_check_branch
      %68 = sbr.rel (0) target = $region29
    $region28: #{tpu_custom_call.1} parent=1 // pred_region
      %69 = dma.done [#allocation6], 256
    $region29: #{tpu_custom_call.1} parent=1 // pred_fallthru
      _
    // Predicated region
    $region30: #{tpu_custom_call.1} parent=1 // pred_check
      _
    $region31: #{tpu_custom_call.1} parent=1 // pred_check_branch
      %71 = sbr.rel (0) target = $region33
    $region32: #{tpu_custom_call.1} parent=1 // pred_region
      %72 = dma.done [#allocation9], 4096
    $region33: #{tpu_custom_call.1} parent=1 // pred_fallthru
      _
    %v73 = vld [vmem:[#allocation2] sm:$0xff]
    %v74 = vld [vmem:[#allocation2 + $0x8] sm:$0xff]
    %v75 = vld [vmem:[#allocation8] sm:$0xff]
    %v76 = vld [vmem:[#allocation8 + $0x8] sm:$0xff]
    %v77 = vld [vmem:[#allocation8 + $0x10] sm:$0xff]
    %v78 = vld [vmem:[#allocation8 + $0x18] sm:$0xff]
    %v79 = vld [vmem:[#allocation8 + $0x20] sm:$0xff]
    %v80 = vld [vmem:[#allocation8 + $0x28] sm:$0xff]
    %v81 = vld [vmem:[#allocation8 + $0x30] sm:$0xff]
    %v82 = vld [vmem:[#allocation8 + $0x38] sm:$0xff]
    %v83 = vld [vmem:[#allocation8 + $0x40] sm:$0xff]
    %v84 = vld [vmem:[#allocation8 + $0x48] sm:$0xff]
    %v85 = vld [vmem:[#allocation8 + $0x50] sm:$0xff]
    %v86 = vld [vmem:[#allocation8 + $0x58] sm:$0xff]
    %v87 = vld [vmem:[#allocation8 + $0x60] sm:$0xff]
    %v88 = vld [vmem:[#allocation8 + $0x68] sm:$0xff]
    %v89 = vld [vmem:[#allocation8 + $0x70] sm:$0xff]
    %v90 = vld [vmem:[#allocation8 + $0x78] sm:$0xff]
    %v91 = vld [vmem:[#allocation8 + $0x80] sm:$0xff]
    %v92 = vld [vmem:[#allocation8 + $0x88] sm:$0xff]
    %v93 = vld [vmem:[#allocation8 + $0x90] sm:$0xff]
    %v94 = vld [vmem:[#allocation8 + $0x98] sm:$0xff]
    %v95 = vld [vmem:[#allocation8 + $0xa0] sm:$0xff]
    %v96 = vld [vmem:[#allocation8 + $0xa8] sm:$0xff]
    %v97 = vld [vmem:[#allocation8 + $0xb0] sm:$0xff]
    %v98 = vld [vmem:[#allocation8 + $0xb8] sm:$0xff]
    %v99 = vld [vmem:[#allocation8 + $0xc0] sm:$0xff]
    %v100 = vld [vmem:[#allocation8 + $0xc8] sm:$0xff]
    %v101 = vld [vmem:[#allocation8 + $0xd0] sm:$0xff]
    %v102 = vld [vmem:[#allocation8 + $0xd8] sm:$0xff]
    %v103 = vld [vmem:[#allocation8 + $0xe0] sm:$0xff]
    %v104 = vld [vmem:[#allocation8 + $0xe8] sm:$0xff]
    %v105 = vld [vmem:[#allocation8 + $0xf0] sm:$0xff]
    %v106 = vld [vmem:[#allocation8 + $0xf8] sm:$0xff]
    %107 = vmatprep.subr.mxu0 %v76
    %108 = vmatpush1.msra.mxu0 %v75
    %109 = vmatprep.subr.mxu0 %v78
    %110 = vmatpush1.msra.mxu0 %v77
    %111 = vmatprep.subr.mxu0 %v80
    %112 = vmatpush1.msra.mxu0 %v79
    %113 = vmatprep.subr.mxu0 %v82
    %114 = vmatpush1.msra.mxu0 %v81
    %115 = vmatprep.subr.mxu0 %v84
    %116 = vmatpush1.msra.mxu0 %v83
    %117 = vmatprep.subr.mxu0 %v86
    %118 = vmatpush1.msra.mxu0 %v85
    %119 = vmatprep.subr.mxu0 %v88
    %120 = vmatpush1.msra.mxu0 %v87
    %121 = vmatprep.subr.mxu0 %v90
    %122 = vmatpush1.msra.mxu0 %v89
    %123 = vmatprep.subr.mxu0 %v92
    %124 = vmatpush1.msra.mxu0 %v91
    %125 = vmatprep.subr.mxu0 %v94
    %126 = vmatpush1.msra.mxu0 %v93
    %127 = vmatprep.subr.mxu0 %v96
    %128 = vmatpush1.msra.mxu0 %v95
    %129 = vmatprep.subr.mxu0 %v98
    %130 = vmatpush1.msra.mxu0 %v97
    %131 = vmatprep.subr.mxu0 %v100
    %132 = vmatpush1.msra.mxu0 %v99
    %133 = vmatprep.subr.mxu0 %v102
    %134 = vmatpush1.msra.mxu0 %v101
    %135 = vmatprep.subr.mxu0 %v104
    %136 = vmatpush1.msra.mxu0 %v103
    %137 = vmatprep.subr.mxu0 %v106
    %138 = vmatpush1.msra.mxu0 %v105
    %139 = vmatprep.subr.mxu0 0.0
    %140 = vmatpush1.msra.mxu0 0.0
    %141 = vmatprep.subr.mxu0 0.0
    %142 = vmatpush1.msra.mxu0 0.0
    %143 = vmatprep.subr.mxu0 0.0
    %144 = vmatpush1.msra.mxu0 0.0
    %145 = vmatprep.subr.mxu0 0.0
    %146 = vmatpush1.msra.mxu0 0.0
    %147 = vmatprep.subr.mxu0 0.0
    %148 = vmatpush1.msra.mxu0 0.0
    %149 = vmatprep.subr.mxu0 0.0
    %150 = vmatpush1.msra.mxu0 0.0
    %151 = vmatprep.subr.mxu0 0.0
    %152 = vmatpush1.msra.mxu0 0.0
    %153 = vmatprep.subr.mxu0 0.0
    %154 = vmatpush1.msra.mxu0 0.0
    %155 = vmatprep.subr.mxu0 0.0
    %156 = vmatpush1.msra.mxu0 0.0
    %157 = vmatprep.subr.mxu0 0.0
    %158 = vmatpush1.msra.mxu0 0.0
    %159 = vmatprep.subr.mxu0 0.0
    %160 = vmatpush1.msra.mxu0 0.0
    %161 = vmatprep.subr.mxu0 0.0
    %162 = vmatpush1.msra.mxu0 0.0
    %163 = vmatprep.subr.mxu0 0.0
    %164 = vmatpush1.msra.mxu0 0.0
    %165 = vmatprep.subr.mxu0 0.0
    %166 = vmatpush1.msra.mxu0 0.0
    %167 = vmatprep.subr.mxu0 0.0
    %168 = vmatpush1.msra.mxu0 0.0
    %169 = vmatprep.subr.mxu0 0.0
    %170 = vmatpush1.msra.mxu0 0.0
    %171 = vmatprep.mubr.f32.mxu0 0.0
    %172 = vmatmul.mubr.f32.gmra.mrb[0].mxu0 %v73
    %v173 = vpop.f32.mrb[0].mxu0
    %v174 = vadd.f32 0.0, %v173
    %v175 = vpop.f32.mrb[0].mxu0
    %v176 = vadd.f32 0.0, %v175
    %177 = vmatprep.mubr.f32.mxu0 0.0
    %178 = vmatmul.mubr.f32.gmra.mrb[0].mxu0 %v74
    %v179 = vpop.f32.mrb[0].mxu0
    %v180 = vadd.f32 0.0, %v179
    %v181 = vpop.f32.mrb[0].mxu0
    %v182 = vadd.f32 0.0, %v181
    %183 = vdwg.mxu0
    %v184 = vld [vmem:[#allocation5] sm:$0xff]
    %v185 = vld [vmem:[#allocation5 + $0x8] sm:$0xff]
    %vm186 = vcmask 130048
    %v188 = vsel %vm186, %v184, 0
    %v191 = vsel %vm186, %v185, 0
    %193 = vmatprep.subr.mxu0 0.0
    %194 = vmatpush1.msra.mxu0 %v174
    %195 = vmatprep.subr.mxu0 0.0
    %196 = vmatpush1.msra.mxu0 %v180
    %197 = vmatprep.subr.mxu0 0.0
    %198 = vmatpush1.msra.mxu0 0.0
    %199 = vmatprep.subr.mxu0 0.0
    %200 = vmatpush1.msra.mxu0 0.0
    %201 = vmatprep.subr.mxu0 0.0
    %202 = vmatpush1.msra.mxu0 0.0
    %203 = vmatprep.subr.mxu0 0.0
    %204 = vmatpush1.msra.mxu0 0.0
    %205 = vmatprep.subr.mxu0 0.0
    %206 = vmatpush1.msra.mxu0 0.0
    %207 = vmatprep.subr.mxu0 0.0
    %208 = vmatpush1.msra.mxu0 0.0
    %209 = vmatprep.subr.mxu0 0.0
    %210 = vmatpush1.msra.mxu0 0.0
    %211 = vmatprep.subr.mxu0 0.0
    %212 = vmatpush1.msra.mxu0 0.0
    %213 = vmatprep.subr.mxu0 0.0
    %214 = vmatpush1.msra.mxu0 0.0
    %215 = vmatprep.subr.mxu0 0.0
    %216 = vmatpush1.msra.mxu0 0.0
    %217 = vmatprep.subr.mxu0 0.0
    %218 = vmatpush1.msra.mxu0 0.0
    %219 = vmatprep.subr.mxu0 0.0
    %220 = vmatpush1.msra.mxu0 0.0
    %221 = vmatprep.subr.mxu0 0.0
    %222 = vmatpush1.msra.mxu0 0.0
    %223 = vmatprep.subr.mxu0 0.0
    %224 = vmatpush1.msra.mxu0 0.0
    %225 = vmatprep.subr.mxu0 0.0
    %226 = vmatpush1.msra.mxu0 0.0
    %227 = vmatprep.subr.mxu0 0.0
    %228 = vmatpush1.msra.mxu0 0.0
    %229 = vmatprep.subr.mxu0 0.0
    %230 = vmatpush1.msra.mxu0 0.0
    %231 = vmatprep.subr.mxu0 0.0
    %232 = vmatpush1.msra.mxu0 0.0
    %233 = vmatprep.subr.mxu0 0.0
    %234 = vmatpush1.msra.mxu0 0.0
    %235 = vmatprep.subr.mxu0 0.0
    %236 = vmatpush1.msra.mxu0 0.0
    %237 = vmatprep.subr.mxu0 0.0
    %238 = vmatpush1.msra.mxu0 0.0
    %239 = vmatprep.subr.mxu0 0.0
    %240 = vmatpush1.msra.mxu0 0.0
    %241 = vmatprep.subr.mxu0 0.0
    %242 = vmatpush1.msra.mxu0 0.0
    %243 = vmatprep.subr.mxu0 0.0
    %244 = vmatpush1.msra.mxu0 0.0
    %245 = vmatprep.subr.mxu0 0.0
    %246 = vmatpush1.msra.mxu0 0.0
    %247 = vmatprep.subr.mxu0 0.0
    %248 = vmatpush1.msra.mxu0 0.0
    %249 = vmatprep.subr.mxu0 0.0
    %250 = vmatpush1.msra.mxu0 0.0
    %251 = vmatprep.subr.mxu0 0.0
    %252 = vmatpush1.msra.mxu0 0.0
    %253 = vmatprep.subr.mxu0 0.0
    %254 = vmatpush1.msra.mxu0 0.0
    %255 = vmatprep.subr.mxu0 0.0
    %256 = vmatpush1.msra.mxu0 0.0
    %257 = vmatprep.mubr.f32.mxu0 0.0
    %258 = vmatmul.mubr.f32.gmra.mrb[0].mxu0 %v188
    %v259 = vpop.f32.mrb[0].mxu0
    %v260 = vadd.f32 0.0, %v259
    %v261 = vpop.f32.mrb[0].mxu0
    %262 = vmatprep.mubr.f32.mxu0 0.0
    %263 = vmatmul.mubr.f32.gmra.mrb[0].mxu0 %v191
    %v264 = vpop.f32.mrb[0].mxu0
    %v265 = vadd.f32 0.0, %v264
    %v266 = vpop.f32.mrb[0].mxu0
    %267 = vdwg.mxu0
    %v268 = vld [vmem:[#allocation7] sm:$0xff]
    %v269 = vld [vmem:[#allocation7 + $0x8] sm:$0xff]
    %v271 = vsel %vm186, %v268, 0
    %v274 = vsel %vm186, %v269, 0
    %276 = vmatprep.subr.mxu0 0.0
    %277 = vmatpush1.msra.mxu0 %v176
    %278 = vmatprep.subr.mxu0 0.0
    %279 = vmatpush1.msra.mxu0 %v182
    %280 = vmatprep.subr.mxu0 0.0
    %281 = vmatpush1.msra.mxu0 0.0
    %282 = vmatprep.subr.mxu0 0.0
    %283 = vmatpush1.msra.mxu0 0.0
    %284 = vmatprep.subr.mxu0 0.0
    %285 = vmatpush1.msra.mxu0 0.0
    %286 = vmatprep.subr.mxu0 0.0
    %287 = vmatpush1.msra.mxu0 0.0
    %288 = vmatprep.subr.mxu0 0.0
    %289 = vmatpush1.msra.mxu0 0.0
    %290 = vmatprep.subr.mxu0 0.0
    %291 = vmatpush1.msra.mxu0 0.0
    %292 = vmatprep.subr.mxu0 0.0
    %293 = vmatpush1.msra.mxu0 0.0
    %294 = vmatprep.subr.mxu0 0.0
    %295 = vmatpush1.msra.mxu0 0.0
    %296 = vmatprep.subr.mxu0 0.0
    %297 = vmatpush1.msra.mxu0 0.0
    %298 = vmatprep.subr.mxu0 0.0
    %299 = vmatpush1.msra.mxu0 0.0
    %300 = vmatprep.subr.mxu0 0.0
    %301 = vmatpush1.msra.mxu0 0.0
    %302 = vmatprep.subr.mxu0 0.0
    %303 = vmatpush1.msra.mxu0 0.0
    %304 = vmatprep.subr.mxu0 0.0
    %305 = vmatpush1.msra.mxu0 0.0
    %306 = vmatprep.subr.mxu0 0.0
    %307 = vmatpush1.msra.mxu0 0.0
    %308 = vmatprep.subr.mxu0 0.0
    %309 = vmatpush1.msra.mxu0 0.0
    %310 = vmatprep.subr.mxu0 0.0
    %311 = vmatpush1.msra.mxu0 0.0
    %312 = vmatprep.subr.mxu0 0.0
    %313 = vmatpush1.msra.mxu0 0.0
    %314 = vmatprep.subr.mxu0 0.0
    %315 = vmatpush1.msra.mxu0 0.0
    %316 = vmatprep.subr.mxu0 0.0
    %317 = vmatpush1.msra.mxu0 0.0
    %318 = vmatprep.subr.mxu0 0.0
    %319 = vmatpush1.msra.mxu0 0.0
    %320 = vmatprep.subr.mxu0 0.0
    %321 = vmatpush1.msra.mxu0 0.0
    %322 = vmatprep.subr.mxu0 0.0
    %323 = vmatpush1.msra.mxu0 0.0
    %324 = vmatprep.subr.mxu0 0.0
    %325 = vmatpush1.msra.mxu0 0.0
    %326 = vmatprep.subr.mxu0 0.0
    %327 = vmatpush1.msra.mxu0 0.0
    %328 = vmatprep.subr.mxu0 0.0
    %329 = vmatpush1.msra.mxu0 0.0
    %330 = vmatprep.subr.mxu0 0.0
    %331 = vmatpush1.msra.mxu0 0.0
    %332 = vmatprep.subr.mxu0 0.0
    %333 = vmatpush1.msra.mxu0 0.0
    %334 = vmatprep.subr.mxu0 0.0
    %335 = vmatpush1.msra.mxu0 0.0
    %336 = vmatprep.subr.mxu0 0.0
    %337 = vmatpush1.msra.mxu0 0.0
    %338 = vmatprep.subr.mxu0 0.0
    %339 = vmatpush1.msra.mxu0 0.0
    %340 = vmatprep.mubr.f32.mxu0 0.0
    %341 = vmatmul.mubr.f32.gmra.mrb[0].mxu0 %v271
    %v342 = vpop.f32.mrb[0].mxu0
    %v343 = vadd.f32 0.0, %v342
    %v344 = vpop.f32.mrb[0].mxu0
    %345 = vmatprep.mubr.f32.mxu0 0.0
    %346 = vmatmul.mubr.f32.gmra.mrb[0].mxu0 %v274
    %v347 = vpop.f32.mrb[0].mxu0
    %v348 = vadd.f32 0.0, %v347
    %v349 = vpop.f32.mrb[0].mxu0
    %350 = vdwg.mxu0
    %v351 = vsub.f32 %v260, %v343
    %v352 = vsub.f32 %v265, %v348
    %v353 = vmax.f32 %v351, 0.0
    %v354 = vmax.f32 %v352, 0.0
    %355 = vst [vmem:[#allocation10] sm:$0xff] %v353
    %356 = vst [vmem:[#allocation10 + $0x8] sm:$0xff] %v354
    // Predicated region
    $region34: #{tpu_custom_call.1} parent=1 // pred_check
      _
    $region35: #{tpu_custom_call.1} parent=1 // pred_check_branch
      %358 = sbr.rel (0) target = $region37
    $region36: #{tpu_custom_call.1} parent=1 // pred_region
      %s360 = ssub.s32 256, 256
      %361 = vsyncadd [#allocation4], %s360
      %s362 = sshll.u32 [#allocation10], 4
      %s363 = int_to_ptr.vmem [resolvable:$true] %s362
      %368 = dma.vmem_to_hbm [thread:$0]  %s363, 256, %s4, [#allocation4], 128, 128, 8
    $region37: #{tpu_custom_call.1} parent=1 // pred_fallthru
      _
    // Predicated region
    $region38: #{tpu_custom_call.1} parent=1 // pred_check
      _
    $region39: #{tpu_custom_call.1} parent=1 // pred_check_branch
      %370 = sbr.rel (0) target = $region41
    $region40: #{tpu_custom_call.1} parent=1 // pred_region
      %371 = dma.done [#allocation4], 256
    $region41: #{tpu_custom_call.1} parent=1 // pred_fallthru
      _
    %372 = vsyncpa [#allocation3], 1
    %373 = vsyncpa [#allocation6], 1
    %374 = vsyncpa [#allocation9], 1
    %375 = vsyncpa [#allocation4], 1

</llo_original>
